<compile_context>
chip_gen: v5e
topology: v5e:2x2
jax: 0.10.0
libtpu: 0.0.40
codegen_flags: <defaults>
</compile_context>

<pallas_src>
import functools

import jax
import jax.numpy as jnp
from jax import lax
from jax.experimental import pallas as pl
from jax.experimental.pallas import tpu as pltpu


# ---------------------------------------------------------------------------
# Kernels
# ---------------------------------------------------------------------------

def _mlp_resident_kernel(x_ref, wgu_ref, wd_ref, o_ref, *, I):
    """Whole-intermediate step; weight blocks are VMEM-resident across grid.

    x_ref  : [tm, H]
    wgu_ref: [H, 2I]   fused [gate | up] weights, K-major (pre-transposed)
    wd_ref : [I, H]    down_proj weights, K-major (pre-transposed)
    o_ref  : [tm, H]
    """
    x = x_ref[...]
    gu = lax.dot_general(
        x, wgu_ref[...],
        dimension_numbers=(((1,), (0,)), ((), ())),
        preferred_element_type=jnp.float32)          # [tm, 2I], f32
    gate = gu[:, :I]
    up = gu[:, I:]
    h = gate * jax.nn.sigmoid(gate) * up             # SiLU(gate)*up in f32
    o_ref[...] = lax.dot_general(
        h.astype(x.dtype), wd_ref[...],
        dimension_numbers=(((1,), (0,)), ((), ())),
        preferred_element_type=jnp.float32).astype(o_ref.dtype)


def _mlp_tiled_kernel(x_ref, wgu_ref, wd_ref, o_ref, acc_ref, *, ti):
    """(token tile i, intermediate tile k) step; reduction over k.

    x_ref  : [tm, H]       token tile (same block for all k)
    wgu_ref: [H, 2*ti]     fused [gate_k | up_k] weight tile, K-major
    wd_ref : [ti, H]       down_proj^T tile (contiguous row slab)
    o_ref  : [tm, H]       output tile (resident across k)
    acc_ref: [tm, H] f32   accumulator scratch
    """
    k = pl.program_id(1)
    x = x_ref[...]
    gu = lax.dot_general(
        x, wgu_ref[...],
        dimension_numbers=(((1,), (0,)), ((), ())),
        preferred_element_type=jnp.float32)          # [tm, 2*ti], f32
    gate = gu[:, :ti]
    up = gu[:, ti:]
    h = gate * jax.nn.sigmoid(gate) * up
    part = lax.dot_general(
        h.astype(x.dtype), wd_ref[...],
        dimension_numbers=(((1,), (0,)), ((), ())),
        preferred_element_type=jnp.float32)          # [tm, H] partial

    @pl.when(k == 0)
    def _():
        acc_ref[...] = part          # skip zero-init + add on first tile

    @pl.when(k > 0)
    def _():
        acc_ref[...] += part

    @pl.when(k == pl.num_programs(1) - 1)
    def _():
        o_ref[...] = acc_ref[...].astype(o_ref.dtype)


# ---------------------------------------------------------------------------
# Config helpers
# ---------------------------------------------------------------------------

def _round_up(x, q):
    return ((x + q - 1) // q) * q


def _dtype_quantum(dtype):
    # Sublane quantum: 8 rows of 32-bit, 16 of 16-bit, 32 of 8-bit.
    return max(8, 32 // jnp.dtype(dtype).itemsize)


def _pick_tile(total, target, quantum):
    """Largest multiple of `quantum` dividing `total` and <= target; falls
    back to the full extent if none exists."""
    t = min(target, total)
    t = (t // quantum) * quantum
    while t >= quantum:
        if total % t == 0:
            return t
        t -= quantum
    return total


def _vmem_capacity_bytes():
    try:
        info = pltpu.get_tpu_info()
        cap = getattr(info, "vmem_capacity_bytes", None)
        if cap:
            return int(cap)
    except Exception:
        pass
    return 64 * 1024 * 1024          # conservative fallback (v7x per-core VMEM)


def _resident_vmem_bytes(tm, H, I, b):
    w = 2 * (3 * I * H) * b                          # weight blocks (2-buffered)
    xo = 2 * 2 * tm * H * b                          # x + out, double-buffered
    tmp = tm * 2 * I * 4 + tm * I * b + tm * H * 4   # gu f32, h, result f32
    return w + xo + tmp


def _tiled_vmem_bytes(tm, ti, H, b):
    w = 2 * (3 * ti * H) * b
    xo = 2 * 2 * tm * H * b
    acc = tm * H * 4
    tmp = tm * 2 * ti * 4 + tm * ti * b + tm * H * 4
    return w + xo + acc + tmp


# ---------------------------------------------------------------------------
# Builder / wrapper
# ---------------------------------------------------------------------------

def make_qwen3_moe_mlp(w_gate, w_up, w_down, *, compute_dtype=jnp.bfloat16,
                       tm=None, ti=None, resident=None,
                       vmem_capacity_bytes=None):
    """Builds the fused SwiGLU MLP forward for fixed weights.

    w_gate: [I, H]  (nn.Linear(hidden, intermediate).weight)
    w_up:   [I, H]
    w_down: [H, I]  (nn.Linear(intermediate, hidden).weight)

    The one-time weight relayout (gate/up fusion + K-major transposes) is done
    here, not per forward call.
    """
    I, H = w_gate.shape
    assert w_up.shape == (I, H) and w_down.shape == (H, I)

    cdt = jnp.dtype(compute_dtype) if compute_dtype is not None else jnp.dtype(w_gate.dtype)
    b = cdt.itemsize
    quantum = _dtype_quantum(cdt)

    cap = vmem_capacity_bytes if vmem_capacity_bytes is not None else _vmem_capacity_bytes()
    tile_budget = int(cap * 0.60)          # leave headroom for Mosaic scratch
    vmem_limit = int(cap * 0.80)

    tm_target = 512 if tm is None else max(quantum, (int(tm) // quantum) * quantum)

    # Residency decision: can the whole expert weight set live in VMEM?
    if resident is None:
        resident = _resident_vmem_bytes(quantum, H, I, b) <= tile_budget

    if resident:
        ti_sel = I
        tm_sel = tm_target
        while tm_sel > quantum and _resident_vmem_bytes(tm_sel, H, I, b) > tile_budget:
            tm_sel -= quantum
    else:
        ti_sel = _pick_tile(I, 256 if ti is None else int(ti), 128)
        tm_sel = tm_target
        while tm_sel > quantum and _tiled_vmem_bytes(tm_sel, ti_sel, H, b) > tile_budget:
            tm_sel -= quantum
    nk = I // ti_sel

    # One-time weight relayout (hoisted out of the per-call path):
    #  * fuse [gate_k | up_k] per intermediate tile and transpose to [H, 2I]
    #    so the first matmul is a plain [M,K]x[K,N] (no MXU-feed transpose);
    #    block k is the contiguous column range [2*ti*k, 2*ti*(k+1)).
    #  * transpose down_proj to [I, H] so its (ti, H) block is a contiguous
    #    row slab and the second matmul is plain [M,K]x[K,N] too.
    w_gate_c = w_gate.astype(cdt)
    w_up_c = w_up.astype(cdt)
    w_down_c = w_down.astype(cdt)
    w_gu_t = jnp.concatenate(
        [w_gate_c.reshape(nk, ti_sel, H), w_up_c.reshape(nk, ti_sel, H)],
        axis=1).reshape(2 * I, H).T                      # [H, 2I]
    wd_t = w_down_c.T                                    # [I, H]

    def apply(x):
        orig_shape = x.shape
        assert orig_shape[-1] == H
        out_dtype = x.dtype
        x2 = x.reshape(-1, H).astype(cdt)
        M0 = x2.shape[0]

        tm_eff = min(tm_sel, _round_up(M0, quantum))
        Mpad = _round_up(M0, tm_eff)
        if Mpad != M0:
            x2 = jnp.pad(x2, ((0, Mpad - M0), (0, 0)))
        nm = Mpad // tm_eff

        if resident:
            grid = (nm,)
            kernel = functools.partial(_mlp_resident_kernel, I=I)
            in_specs = [
                pl.BlockSpec((tm_eff, H), lambda i: (i, 0)),
                pl.BlockSpec((H, 2 * I), lambda i: (0, 0)),   # fetched once
                pl.BlockSpec((I, H), lambda i: (0, 0)),       # fetched once
            ]
            out_specs = pl.BlockSpec((tm_eff, H), lambda i: (i, 0))
            scratch = []
            dims = ("parallel",)
        else:
            grid = (nm, nk)
            kernel = functools.partial(_mlp_tiled_kernel, ti=ti_sel)
            in_specs = [
                pl.BlockSpec((tm_eff, H), lambda i, k: (i, 0)),
                pl.BlockSpec((H, 2 * ti_sel), lambda i, k: (0, k)),
                pl.BlockSpec((ti_sel, H), lambda i, k: (k, 0)),
            ]
            out_specs = pl.BlockSpec((tm_eff, H), lambda i, k: (i, 0))
            scratch = [pltpu.VMEM((tm_eff, H), jnp.float32)]
            dims = ("parallel", "arbitrary")

        out = pl.pallas_call(
            kernel,
            out_shape=jax.ShapeDtypeStruct((Mpad, H), x2.dtype),
            grid_spec=pltpu.PrefetchScalarGridSpec(
                num_scalar_prefetch=0,
                grid=grid,
                in_specs=in_specs,
                out_specs=out_specs,
                scratch_shapes=scratch,
            ),
            compiler_params=pltpu.CompilerParams(
                dimension_semantics=dims,
                vmem_limit_bytes=vmem_limit),
        )(x2, w_gu_t, wd_t)

        if Mpad != M0:
            out = out[:M0]
        return out.reshape(orig_shape).astype(out_dtype)

    return apply


def qwen3_moe_mlp(x, w_gate, w_up, w_down, **kwargs):
    """One-shot convenience wrapper. For production, call make_qwen3_moe_mlp
    once per expert and reuse the returned function (hoists weight relayout)."""
    return make_qwen3_moe_mlp(w_gate, w_up, w_down, **kwargs)(x)


def qwen3_moe_mlp_ref(x, w_gate, w_up, w_down):
    gate = x @ w_gate.T
    up = x @ w_up.T
    return (jax.nn.silu(gate) * up) @ w_down.T


if __name__ == "__main__":
    # Small shapes consistent with the module (hidden_size, intermediate_size).
    batch, seq, hidden, intermediate = 2, 8, 128, 512

    key = jax.random.PRNGKey(0)
    kx, kg, ku, kd = jax.random.split(key, 4)

    x = jax.random.normal(kx, (batch, seq, hidden), dtype=jnp.float32)
    # nn.Linear(in=hidden, out=intermediate).weight -> [intermediate, hidden]
    w_gate = jax.random.normal(kg, (intermediate, hidden), dtype=jnp.float32) * 0.02
    w_up = jax.random.normal(ku, (intermediate, hidden), dtype=jnp.float32) * 0.02
    # nn.Linear(in=intermediate, out=hidden).weight -> [hidden, intermediate]
    w_down = jax.random.normal(kd, (hidden, intermediate), dtype=jnp.float32) * 0.02

    y_ref = qwen3_moe_mlp_ref(x, w_gate, w_up, w_down)

    # f32, resident-weight fast path (weights easily fit VMEM at this size).
    y = qwen3_moe_mlp(x, w_gate, w_up, w_down, compute_dtype=jnp.float32)
    y = jax.block_until_ready(y)
    assert y.shape == x.shape
    assert jnp.allclose(y, y_ref, atol=1e-4, rtol=1e-4), "f32 resident mismatch"

    # f32, forced tiled (k-reduction) fallback path.
    y_t = qwen3_moe_mlp(x, w_gate, w_up, w_down, compute_dtype=jnp.float32,
                        resident=False, ti=128)
    y_t = jax.block_until_ready(y_t)
    assert jnp.allclose(y_t, y_ref, atol=1e-4, rtol=1e-4), "f32 tiled mismatch"

    # bf16 compute (production default): loose tolerance.
    y_bf16 = qwen3_moe_mlp(x, w_gate, w_up, w_down)
    y_bf16 = jax.block_until_ready(y_bf16)
    assert jnp.allclose(y_bf16.astype(jnp.float32), y_ref, atol=3e-2, rtol=3e-2), \
        "bf16 mismatch vs reference"

    print("KERNEL_OK")
</pallas_src>

<mosaic_0001>
module attributes {stable_mosaic.version = 11 : i64} {
  func.func @_mlp_resident_kernel(%arg0: i32, %arg1: memref<16x128xf32, #tpu.memory_space<vmem>>, %arg2: memref<128x1024xf32, #tpu.memory_space<vmem>>, %arg3: memref<512x128xf32, #tpu.memory_space<vmem>>, %arg4: memref<16x128xf32, #tpu.memory_space<vmem>>) attributes {dimension_semantics = [#tpu.dimension_semantics<parallel>], iteration_bounds = array<i64: 1>, scalar_prefetch = 0 : i64, scratch_operands = 0 : i64, tpu.core_type = #tpu.core_type<tc>, window_params = [{transform_indices = @transform_0, window_bounds = array<i64: 16, 128>}, {pipeline_mode = #tpu.pipeline_mode<synchronous>, transform_indices = @transform_1, window_bounds = array<i64: 128, 1024>}, {pipeline_mode = #tpu.pipeline_mode<synchronous>, transform_indices = @transform_2, window_bounds = array<i64: 512, 128>}, {transform_indices = @transform_3, window_bounds = array<i64: 16, 128>}]} {
    %c0 = arith.constant 0 : index
    %c0_0 = arith.constant 0 : index
    %0 = vector.load %arg1[%c0, %c0_0] : memref<16x128xf32, #tpu.memory_space<vmem>>, vector<16x128xf32>
    %c0_1 = arith.constant 0 : index
    %c0_2 = arith.constant 0 : index
    %1 = vector.load %arg2[%c0_1, %c0_2] : memref<128x1024xf32, #tpu.memory_space<vmem>>, vector<128x1024xf32>
    %cst = arith.constant dense<0.000000e+00> : vector<16x1024xf32>
    %2 = tpu.matmul %0, %1, %cst {dimension_numbers = #tpu.dot_dimension_numbers<[1], [0], [0], [1], [0, 0, 1, 1], [], []>} : vector<16x128xf32>, vector<128x1024xf32>, vector<16x1024xf32> -> vector<16x1024xf32>
    %3 = vector.extract_strided_slice %2 {offsets = [0, 0], sizes = [16, 512], strides = [1, 1]} : vector<16x1024xf32> to vector<16x512xf32>
    %4 = vector.extract_strided_slice %2 {offsets = [0, 512], sizes = [16, 512], strides = [1, 1]} : vector<16x1024xf32> to vector<16x512xf32>
    %5 = arith.negf %3 : vector<16x512xf32>
    %6 = math.exp %5 : vector<16x512xf32>
    %cst_3 = arith.constant 1.000000e+00 : f32
    %7 = vector.broadcast %cst_3 : f32 to vector<16x512xf32>
    %8 = arith.addf %7, %6 : vector<16x512xf32>
    %9 = arith.divf %7, %8 : vector<16x512xf32>
    %10 = arith.mulf %3, %9 : vector<16x512xf32>
    %11 = arith.mulf %10, %4 : vector<16x512xf32>
    %c0_4 = arith.constant 0 : index
    %c0_5 = arith.constant 0 : index
    %12 = vector.load %arg3[%c0_4, %c0_5] : memref<512x128xf32, #tpu.memory_space<vmem>>, vector<512x128xf32>
    %cst_6 = arith.constant dense<0.000000e+00> : vector<16x128xf32>
    %13 = tpu.matmul %11, %12, %cst_6 {dimension_numbers = #tpu.dot_dimension_numbers<[1], [0], [0], [1], [0, 0, 1, 1], [], []>} : vector<16x512xf32>, vector<512x128xf32>, vector<16x128xf32> -> vector<16x128xf32>
    %c0_7 = arith.constant 0 : index
    %c0_8 = arith.constant 0 : index
    %14 = vector.load %arg4[%c0_7, %c0_8] : memref<16x128xf32, #tpu.memory_space<vmem>>, vector<16x128xf32>
    tpu.vector_store %arg4[%c0_7, %c0_8], %13 {strides = array<i32>} : memref<16x128xf32, #tpu.memory_space<vmem>>, vector<16x128xf32>,
    return
  }
  func.func @transform_0(%arg0: i32) -> (i32, i32) {
    %c0_i32 = arith.constant 0 : i32
    %c0_i32_0 = arith.constant 0 : i32
    return %arg0, %c0_i32 : i32, i32
  }
  func.func @transform_1(%arg0: i32) -> (i32, i32) {
    %c0_i32 = arith.constant 0 : i32
    %c0_i32_0 = arith.constant 0 : i32
    %c0_i32_1 = arith.constant 0 : i32
    return %c0_i32, %c0_i32_0 : i32, i32
  }
  func.func @transform_2(%arg0: i32) -> (i32, i32) {
    %c0_i32 = arith.constant 0 : i32
    %c0_i32_0 = arith.constant 0 : i32
    %c0_i32_1 = arith.constant 0 : i32
    return %c0_i32, %c0_i32_0 : i32, i32
  }
  func.func @transform_3(%arg0: i32) -> (i32, i32) {
    %c0_i32 = arith.constant 0 : i32
    %c0_i32_0 = arith.constant 0 : i32
    return %arg0, %c0_i32 : i32, i32
  }
}

</mosaic_0001>

<llo_original>
// kernel: tpu_custom_call.1
$region0: #{tpu_custom_call.1}
  #allocation0 [shape = 'u32[]', space=smem, size = 0x4, offset = 0x4, fixed_abs, tag = 'smem constant byte address 0x4 - core index']
  #allocation1 [shape = 'u32[72,128]{1,0:T(1,128)}', space=vmem, size = 0x9000, scoped, tag = 'internal scratch']
  %s0 = inlined_call_operand.hbm [shape: f32[16,128], index: 0, kind: input, shape index: {}]
  %s1 = inlined_call_operand.hbm [shape: f32[128,1024], index: 1, kind: input, shape index: {}]
  %s2 = inlined_call_operand.hbm [shape: f32[512,128], index: 2, kind: input, shape index: {}]
  %s3 = inlined_call_operand.hbm [shape: f32[16,128], index: 3, kind: output, shape index: {}]
  %s4 = sld [smem:[#allocation0]]
  $region34: #{tpu_custom_call.1} parent=0
    _
  %s6 = ssub.s32 1, %s4
  %s7 = scalar_select 0, %s6, %s4
  $region1: #{tpu_custom_call.1} parent=0
    #allocation2 [shape = 'u8[8192]{0}', space=vmem, size = 0x2000, scoped, tag = 'input window, operand 0, single buffered']
    #allocation3 [shape = 's32[1]{0}', space=sflag, size = 0x4, scoped, tag = 'scoped memory for tpu_custom_call.1']
    #allocation4 [shape = 's32[1]{0}', space=sflag, size = 0x4, scoped, tag = 'scoped memory for tpu_custom_call.1']
    #allocation5 [shape = 'u8[524288]{0}', space=vmem, size = 0x80000, scoped, tag = 'input window, operand 1, single buffered']
    #allocation6 [shape = 's32[1]{0}', space=sflag, size = 0x4, scoped, tag = 'scoped memory for tpu_custom_call.1']
    #allocation7 [shape = 'u8[262144]{0}', space=vmem, size = 0x40000, scoped, tag = 'input window, operand 2, single buffered']
    #allocation8 [shape = 'u8[8192]{0}', space=vmem, size = 0x2000, scoped, tag = 'output window, operand 0, single buffered']
    %8 = vsyncpa [#allocation3], 0
    %9 = vsyncpa [#allocation6], 0
    %10 = vsyncpa [#allocation4], 0
    // Predicated region
    $region2: #{tpu_custom_call.1} parent=1 // pred_check
      _
    $region3: #{tpu_custom_call.1} parent=1 // pred_check_branch
      %12 = sbr.rel (0) target = $region5
    $region4: #{tpu_custom_call.1} parent=1 // pred_region
      %14 = vsyncadd [#allocation3], 0
      %s15 = sshll.u32 %s0, 4
      %s16 = int_to_ptr.hbm [resolvable:$true] %s15
      %s17 = sshll.u32 [#allocation2], 4
      %s18 = int_to_ptr.vmem [resolvable:$true] %s17
      %23 = dma.hbm_to_vmem [thread:$0]  %s16, 256, %s18, [#allocation3], 128, 128, 8
    $region5: #{tpu_custom_call.1} parent=1 // pred_fallthru
      _
    // Predicated region
    $region6: #{tpu_custom_call.1} parent=1 // pred_check
      _
    $region7: #{tpu_custom_call.1} parent=1 // pred_check_branch
      %25 = sbr.rel (0) target = $region9
    $region8: #{tpu_custom_call.1} parent=1 // pred_region
      %27 = vsyncadd [#allocation6], 0
      %s28 = sshll.u32 %s1, 4
      %s29 = int_to_ptr.hbm [resolvable:$true] %s28
      %s30 = sshll.u32 [#allocation5], 4
      %s31 = int_to_ptr.vmem [resolvable:$true] %s30
      %36 = dma.hbm_to_vmem [thread:$0]  %s29, 16384, %s31, [#allocation6], 1024, 1024, 64
    $region9: #{tpu_custom_call.1} parent=1 // pred_fallthru
      _
    // Predicated region
    $region10: #{tpu_custom_call.1} parent=1 // pred_check
      _
    $region11: #{tpu_custom_call.1} parent=1 // pred_check_branch
      %38 = sbr.rel (0) target = $region13
    $region12: #{tpu_custom_call.1} parent=1 // pred_region
      %40 = vsyncadd [#allocation6], 0
      %s41 = sshll.u32 %s2, 4
      %s42 = int_to_ptr.hbm [resolvable:$true] %s41
      %s43 = sshll.u32 [#allocation7], 4
      %s44 = int_to_ptr.vmem [resolvable:$true] %s43
      %49 = dma.hbm_to_vmem [thread:$0]  %s42, 8192, %s44, [#allocation6], 128, 128, 8
    $region13: #{tpu_custom_call.1} parent=1 // pred_fallthru
      _
    // Predicated region
    $region14: #{tpu_custom_call.1} parent=1 // pred_check
      _
    $region15: #{tpu_custom_call.1} parent=1 // pred_check_branch
      %51 = sbr.rel (0) target = $region17
    $region16: #{tpu_custom_call.1} parent=1 // pred_region
      %53 = dma.done [#allocation3], 256
    $region17: #{tpu_custom_call.1} parent=1 // pred_fallthru
      _
    // Predicated region
    $region18: #{tpu_custom_call.1} parent=1 // pred_check
      _
    $region19: #{tpu_custom_call.1} parent=1 // pred_check_branch
      %55 = sbr.rel (0) target = $region21
    $region20: #{tpu_custom_call.1} parent=1 // pred_region
      %57 = dma.done [#allocation6], 16384
    $region21: #{tpu_custom_call.1} parent=1 // pred_fallthru
      _
    // Predicated region
    $region22: #{tpu_custom_call.1} parent=1 // pred_check
      _
    $region23: #{tpu_custom_call.1} parent=1 // pred_check_branch
      %59 = sbr.rel (0) target = $region25
    $region24: #{tpu_custom_call.1} parent=1 // pred_region
      %61 = dma.done [#allocation6], 8192
    $region25: #{tpu_custom_call.1} parent=1 // pred_fallthru
      _
    %v62 = vld [vmem:[#allocation2] sm:$0xff]
    %v63 = vld [vmem:[#allocation2 + $0x8] sm:$0xff]
    %v64 = vld [vmem:[#allocation5] sm:$0xff]
    %v65 = vld [vmem:[#allocation5 + $0x8] sm:$0xff]
    %v66 = vld [vmem:[#allocation5 + $0x10] sm:$0xff]
    %v67 = vld [vmem:[#allocation5 + $0x18] sm:$0xff]
    %v68 = vld [vmem:[#allocation5 + $0x20] sm:$0xff]
    %v69 = vld [vmem:[#allocation5 + $0x28] sm:$0xff]
    %v70 = vld [vmem:[#allocation5 + $0x30] sm:$0xff]
    %v71 = vld [vmem:[#allocation5 + $0x38] sm:$0xff]
    %v72 = vld [vmem:[#allocation5 + $0x40] sm:$0xff]
    %v73 = vld [vmem:[#allocation5 + $0x48] sm:$0xff]
    %v74 = vld [vmem:[#allocation5 + $0x50] sm:$0xff]
    %v75 = vld [vmem:[#allocation5 + $0x58] sm:$0xff]
    %v76 = vld [vmem:[#allocation5 + $0x60] sm:$0xff]
    %v77 = vld [vmem:[#allocation5 + $0x68] sm:$0xff]
    %v78 = vld [vmem:[#allocation5 + $0x70] sm:$0xff]
    %v79 = vld [vmem:[#allocation5 + $0x78] sm:$0xff]
    %v80 = vld [vmem:[#allocation5 + $0x80] sm:$0xff]
    %v81 = vld [vmem:[#allocation5 + $0x88] sm:$0xff]
    %v82 = vld [vmem:[#allocation5 + $0x90] sm:$0xff]
    %v83 = vld [vmem:[#allocation5 + $0x98] sm:$0xff]
    %v84 = vld [vmem:[#allocation5 + $0xa0] sm:$0xff]
    %v85 = vld [vmem:[#allocation5 + $0xa8] sm:$0xff]
    %v86 = vld [vmem:[#allocation5 + $0xb0] sm:$0xff]
    %v87 = vld [vmem:[#allocation5 + $0xb8] sm:$0xff]
    %v88 = vld [vmem:[#allocation5 + $0xc0] sm:$0xff]
    %v89 = vld [vmem:[#allocation5 + $0xc8] sm:$0xff]
    %v90 = vld [vmem:[#allocation5 + $0xd0] sm:$0xff]
    %v91 = vld [vmem:[#allocation5 + $0xd8] sm:$0xff]
    %v92 = vld [vmem:[#allocation5 + $0xe0] sm:$0xff]
    %v93 = vld [vmem:[#allocation5 + $0xe8] sm:$0xff]
    %v94 = vld [vmem:[#allocation5 + $0xf0] sm:$0xff]
    %v95 = vld [vmem:[#allocation5 + $0xf8] sm:$0xff]
    %v96 = vld [vmem:[#allocation5 + $0x100] sm:$0xff]
    %v97 = vld [vmem:[#allocation5 + $0x108] sm:$0xff]
    %v98 = vld [vmem:[#allocation5 + $0x110] sm:$0xff]
    %v99 = vld [vmem:[#allocation5 + $0x118] sm:$0xff]
    %v100 = vld [vmem:[#allocation5 + $0x120] sm:$0xff]
    %v101 = vld [vmem:[#allocation5 + $0x128] sm:$0xff]
    %v102 = vld [vmem:[#allocation5 + $0x130] sm:$0xff]
    %v103 = vld [vmem:[#allocation5 + $0x138] sm:$0xff]
    %v104 = vld [vmem:[#allocation5 + $0x140] sm:$0xff]
    %v105 = vld [vmem:[#allocation5 + $0x148] sm:$0xff]
    %v106 = vld [vmem:[#allocation5 + $0x150] sm:$0xff]
    %v107 = vld [vmem:[#allocation5 + $0x158] sm:$0xff]
    %v108 = vld [vmem:[#allocation5 + $0x160] sm:$0xff]
    %v109 = vld [vmem:[#allocation5 + $0x168] sm:$0xff]
    %v110 = vld [vmem:[#allocation5 + $0x170] sm:$0xff]
    %v111 = vld [vmem:[#allocation5 + $0x178] sm:$0xff]
    %v112 = vld [vmem:[#allocation5 + $0x180] sm:$0xff]
    %v113 = vld [vmem:[#allocation5 + $0x188] sm:$0xff]
    %v114 = vld [vmem:[#allocation5 + $0x190] sm:$0xff]
    %v115 = vld [vmem:[#allocation5 + $0x198] sm:$0xff]
    %v116 = vld [vmem:[#allocation5 + $0x1a0] sm:$0xff]
    %v117 = vld [vmem:[#allocation5 + $0x1a8] sm:$0xff]
    %v118 = vld [vmem:[#allocation5 + $0x1b0] sm:$0xff]
    %v119 = vld [vmem:[#allocation5 + $0x1b8] sm:$0xff]
    %v120 = vld [vmem:[#allocation5 + $0x1c0] sm:$0xff]
    %v121 = vld [vmem:[#allocation5 + $0x1c8] sm:$0xff]
    %v122 = vld [vmem:[#allocation5 + $0x1d0] sm:$0xff]
    %v123 = vld [vmem:[#allocation5 + $0x1d8] sm:$0xff]
    %v124 = vld [vmem:[#allocation5 + $0x1e0] sm:$0xff]
    %v125 = vld [vmem:[#allocation5 + $0x1e8] sm:$0xff]
    %v126 = vld [vmem:[#allocation5 + $0x1f0] sm:$0xff]
    %v127 = vld [vmem:[#allocation5 + $0x1f8] sm:$0xff]
    %v128 = vld [vmem:[#allocation5 + $0x200] sm:$0xff]
    %v129 = vld [vmem:[#allocation5 + $0x208] sm:$0xff]
    %v130 = vld [vmem:[#allocation5 + $0x210] sm:$0xff]
    %v131 = vld [vmem:[#allocation5 + $0x218] sm:$0xff]
    %v132 = vld [vmem:[#allocation5 + $0x220] sm:$0xff]
    %v133 = vld [vmem:[#allocation5 + $0x228] sm:$0xff]
    %v134 = vld [vmem:[#allocation5 + $0x230] sm:$0xff]
    %v135 = vld [vmem:[#allocation5 + $0x238] sm:$0xff]
    %v136 = vld [vmem:[#allocation5 + $0x240] sm:$0xff]
    %v137 = vld [vmem:[#allocation5 + $0x248] sm:$0xff]
    %v138 = vld [vmem:[#allocation5 + $0x250] sm:$0xff]
    %v139 = vld [vmem:[#allocation5 + $0x258] sm:$0xff]
    %v140 = vld [vmem:[#allocation5 + $0x260] sm:$0xff]
    %v141 = vld [vmem:[#allocation5 + $0x268] sm:$0xff]
    %v142 = vld [vmem:[#allocation5 + $0x270] sm:$0xff]
    %v143 = vld [vmem:[#allocation5 + $0x278] sm:$0xff]
    %v144 = vld [vmem:[#allocation5 + $0x280] sm:$0xff]
    %v145 = vld [vmem:[#allocation5 + $0x288] sm:$0xff]
    %v146 = vld [vmem:[#allocation5 + $0x290] sm:$0xff]
    %v147 = vld [vmem:[#allocation5 + $0x298] sm:$0xff]
    %v148 = vld [vmem:[#allocation5 + $0x2a0] sm:$0xff]
    %v149 = vld [vmem:[#allocation5 + $0x2a8] sm:$0xff]
    %v150 = vld [vmem:[#allocation5 + $0x2b0] sm:$0xff]
    %v151 = vld [vmem:[#allocation5 + $0x2b8] sm:$0xff]
    %v152 = vld [vmem:[#allocation5 + $0x2c0] sm:$0xff]
    %v153 = vld [vmem:[#allocation5 + $0x2c8] sm:$0xff]
    %v154 = vld [vmem:[#allocation5 + $0x2d0] sm:$0xff]
    %v155 = vld [vmem:[#allocation5 + $0x2d8] sm:$0xff]
    %v156 = vld [vmem:[#allocation5 + $0x2e0] sm:$0xff]
    %v157 = vld [vmem:[#allocation5 + $0x2e8] sm:$0xff]
    %v158 = vld [vmem:[#allocation5 + $0x2f0] sm:$0xff]
    %v159 = vld [vmem:[#allocation5 + $0x2f8] sm:$0xff]
    %v160 = vld [vmem:[#allocation5 + $0x300] sm:$0xff]
    %v161 = vld [vmem:[#allocation5 + $0x308] sm:$0xff]
    %v162 = vld [vmem:[#allocation5 + $0x310] sm:$0xff]
    %v163 = vld [vmem:[#allocation5 + $0x318] sm:$0xff]
    %v164 = vld [vmem:[#allocation5 + $0x320] sm:$0xff]
    %v165 = vld [vmem:[#allocation5 + $0x328] sm:$0xff]
    %v166 = vld [vmem:[#allocation5 + $0x330] sm:$0xff]
    %v167 = vld [vmem:[#allocation5 + $0x338] sm:$0xff]
    %v168 = vld [vmem:[#allocation5 + $0x340] sm:$0xff]
    %v169 = vld [vmem:[#allocation5 + $0x348] sm:$0xff]
    %v170 = vld [vmem:[#allocation5 + $0x350] sm:$0xff]
    %v171 = vld [vmem:[#allocation5 + $0x358] sm:$0xff]
    %v172 = vld [vmem:[#allocation5 + $0x360] sm:$0xff]
    %v173 = vld [vmem:[#allocation5 + $0x368] sm:$0xff]
    %v174 = vld [vmem:[#allocation5 + $0x370] sm:$0xff]
    %v175 = vld [vmem:[#allocation5 + $0x378] sm:$0xff]
    %v176 = vld [vmem:[#allocation5 + $0x380] sm:$0xff]
    %v177 = vld [vmem:[#allocation5 + $0x388] sm:$0xff]
    %v178 = vld [vmem:[#allocation5 + $0x390] sm:$0xff]
    %v179 = vld [vmem:[#allocation5 + $0x398] sm:$0xff]
    %v180 = vld [vmem:[#allocation5 + $0x3a0] sm:$0xff]
    %v181 = vld [vmem:[#allocation5 + $0x3a8] sm:$0xff]
    %v182 = vld [vmem:[#allocation5 + $0x3b0] sm:$0xff]
    %v183 = vld [vmem:[#allocation5 + $0x3b8] sm:$0xff]
    %v184 = vld [vmem:[#allocation5 + $0x3c0] sm:$0xff]
    %v185 = vld [vmem:[#allocation5 + $0x3c8] sm:$0xff]
    %v186 = vld [vmem:[#allocation5 + $0x3d0] sm:$0xff]
    %v187 = vld [vmem:[#allocation5 + $0x3d8] sm:$0xff]
    %v188 = vld [vmem:[#allocation5 + $0x3e0] sm:$0xff]
    %v189 = vld [vmem:[#allocation5 + $0x3e8] sm:$0xff]
    %v190 = vld [vmem:[#allocation5 + $0x3f0] sm:$0xff]
    %v191 = vld [vmem:[#allocation5 + $0x3f8] sm:$0xff]
    %192 = vmatpush.msra.mxu0 %v184
    %193 = vmatpush.msra.mxu0 %v176
    %194 = vmatpush.msra.mxu0 %v168
    %195 = vmatpush.msra.mxu0 %v160
    %196 = vmatpush.msra.mxu0 %v152
    %197 = vmatpush.msra.mxu0 %v144
    %198 = vmatpush.msra.mxu0 %v136
    %199 = vmatpush.msra.mxu0 %v128
    %200 = vmatpush.msra.mxu0 %v120
    %201 = vmatpush.msra.mxu0 %v112
    %202 = vmatpush.msra.mxu0 %v104
    %203 = vmatpush.msra.mxu0 %v96
    %204 = vmatpush.msra.mxu0 %v88
    %205 = vmatpush.msra.mxu0 %v80
    %206 = vmatpush.msra.mxu0 %v72
    %207 = vmatpush.msra.mxu0 %v64
    %208 = vmatmul.f32.gmra.mxu0 %v62
    %v209 = vpop.f32.mrf.mxu0
    %v210 = vadd.f32 0.0, %v209
    %211 = vmatmul.f32.gmra.mxu0 %v63
    %v212 = vpop.f32.mrf.mxu0
    %v213 = vadd.f32 0.0, %v212
    %214 = vdwg.mxu0
    %215 = vmatpush.msra.mxu0 %v185
    %216 = vmatpush.msra.mxu0 %v177
    %217 = vmatpush.msra.mxu0 %v169
    %218 = vmatpush.msra.mxu0 %v161
    %219 = vmatpush.msra.mxu0 %v153
    %220 = vmatpush.msra.mxu0 %v145
    %221 = vmatpush.msra.mxu0 %v137
    %222 = vmatpush.msra.mxu0 %v129
    %223 = vmatpush.msra.mxu0 %v121
    %224 = vmatpush.msra.mxu0 %v113
    %225 = vmatpush.msra.mxu0 %v105
    %226 = vmatpush.msra.mxu0 %v97
    %227 = vmatpush.msra.mxu0 %v89
    %228 = vmatpush.msra.mxu0 %v81
    %229 = vmatpush.msra.mxu0 %v73
    %230 = vmatpush.msra.mxu0 %v65
    %231 = vmatmul.f32.gmra.mxu0 %v62
    %v232 = vpop.f32.mrf.mxu0
    %v233 = vadd.f32 0.0, %v232
    %234 = vmatmul.f32.gmra.mxu0 %v63
    %v235 = vpop.f32.mrf.mxu0
    %v236 = vadd.f32 0.0, %v235
    %237 = vdwg.mxu0
    %238 = vmatpush.msra.mxu0 %v186
    %239 = vmatpush.msra.mxu0 %v178
    %240 = vmatpush.msra.mxu0 %v170
    %241 = vmatpush.msra.mxu0 %v162
    %242 = vmatpush.msra.mxu0 %v154
    %243 = vmatpush.msra.mxu0 %v146
    %244 = vmatpush.msra.mxu0 %v138
    %245 = vmatpush.msra.mxu0 %v130
    %246 = vmatpush.msra.mxu0 %v122
    %247 = vmatpush.msra.mxu0 %v114
    %248 = vmatpush.msra.mxu0 %v106
    %249 = vmatpush.msra.mxu0 %v98
    %250 = vmatpush.msra.mxu0 %v90
    %251 = vmatpush.msra.mxu0 %v82
    %252 = vmatpush.msra.mxu0 %v74
    %253 = vmatpush.msra.mxu0 %v66
    %254 = vmatmul.f32.gmra.mxu0 %v62
    %v255 = vpop.f32.mrf.mxu0
    %v256 = vadd.f32 0.0, %v255
    %257 = vmatmul.f32.gmra.mxu0 %v63
    %v258 = vpop.f32.mrf.mxu0
    %v259 = vadd.f32 0.0, %v258
    %260 = vdwg.mxu0
    %261 = vmatpush.msra.mxu0 %v187
    %262 = vmatpush.msra.mxu0 %v179
    %263 = vmatpush.msra.mxu0 %v171
    %264 = vmatpush.msra.mxu0 %v163
    %265 = vmatpush.msra.mxu0 %v155
    %266 = vmatpush.msra.mxu0 %v147
    %267 = vmatpush.msra.mxu0 %v139
    %268 = vmatpush.msra.mxu0 %v131
    %269 = vmatpush.msra.mxu0 %v123
    %270 = vmatpush.msra.mxu0 %v115
    %271 = vmatpush.msra.mxu0 %v107
    %272 = vmatpush.msra.mxu0 %v99
    %273 = vmatpush.msra.mxu0 %v91
    %274 = vmatpush.msra.mxu0 %v83
    %275 = vmatpush.msra.mxu0 %v75
    %276 = vmatpush.msra.mxu0 %v67
    %277 = vmatmul.f32.gmra.mxu0 %v62
    %v278 = vpop.f32.mrf.mxu0
    %v279 = vadd.f32 0.0, %v278
    %280 = vmatmul.f32.gmra.mxu0 %v63
    %v281 = vpop.f32.mrf.mxu0
    %v282 = vadd.f32 0.0, %v281
    %283 = vdwg.mxu0
    %284 = vmatpush.msra.mxu0 %v188
    %285 = vmatpush.msra.mxu0 %v180
    %286 = vmatpush.msra.mxu0 %v172
    %287 = vmatpush.msra.mxu0 %v164
    %288 = vmatpush.msra.mxu0 %v156
    %289 = vmatpush.msra.mxu0 %v148
    %290 = vmatpush.msra.mxu0 %v140
    %291 = vmatpush.msra.mxu0 %v132
    %292 = vmatpush.msra.mxu0 %v124
    %293 = vmatpush.msra.mxu0 %v116
    %294 = vmatpush.msra.mxu0 %v108
    %295 = vmatpush.msra.mxu0 %v100
    %296 = vmatpush.msra.mxu0 %v92
    %297 = vmatpush.msra.mxu0 %v84
    %298 = vmatpush.msra.mxu0 %v76
    %299 = vmatpush.msra.mxu0 %v68
    %300 = vmatmul.f32.gmra.mxu0 %v62
    %v301 = vpop.f32.mrf.mxu0
    %v302 = vadd.f32 0.0, %v301
    %303 = vmatmul.f32.gmra.mxu0 %v63
    %v304 = vpop.f32.mrf.mxu0
    %v305 = vadd.f32 0.0, %v304
    %306 = vdwg.mxu0
    %307 = vmatpush.msra.mxu0 %v189
    %308 = vmatpush.msra.mxu0 %v181
    %309 = vmatpush.msra.mxu0 %v173
    %310 = vmatpush.msra.mxu0 %v165
    %311 = vmatpush.msra.mxu0 %v157
    %312 = vmatpush.msra.mxu0 %v149
    %313 = vmatpush.msra.mxu0 %v141
    %314 = vmatpush.msra.mxu0 %v133
    %315 = vmatpush.msra.mxu0 %v125
    %316 = vmatpush.msra.mxu0 %v117
    %317 = vmatpush.msra.mxu0 %v109
    %318 = vmatpush.msra.mxu0 %v101
    %319 = vmatpush.msra.mxu0 %v93
    %320 = vmatpush.msra.mxu0 %v85
    %321 = vmatpush.msra.mxu0 %v77
    %322 = vmatpush.msra.mxu0 %v69
    %323 = vmatmul.f32.gmra.mxu0 %v62
    %v324 = vpop.f32.mrf.mxu0
    %v325 = vadd.f32 0.0, %v324
    %326 = vmatmul.f32.gmra.mxu0 %v63
    %v327 = vpop.f32.mrf.mxu0
    %v328 = vadd.f32 0.0, %v327
    %329 = vdwg.mxu0
    %330 = vmatpush.msra.mxu0 %v190
    %331 = vmatpush.msra.mxu0 %v182
    %332 = vmatpush.msra.mxu0 %v174
    %333 = vmatpush.msra.mxu0 %v166
    %334 = vmatpush.msra.mxu0 %v158
    %335 = vmatpush.msra.mxu0 %v150
    %336 = vmatpush.msra.mxu0 %v142
    %337 = vmatpush.msra.mxu0 %v134
    %338 = vmatpush.msra.mxu0 %v126
    %339 = vmatpush.msra.mxu0 %v118
    %340 = vmatpush.msra.mxu0 %v110
    %341 = vmatpush.msra.mxu0 %v102
    %342 = vmatpush.msra.mxu0 %v94
    %343 = vmatpush.msra.mxu0 %v86
    %344 = vmatpush.msra.mxu0 %v78
    %345 = vmatpush.msra.mxu0 %v70
    %346 = vmatmul.f32.gmra.mxu0 %v62
    %v347 = vpop.f32.mrf.mxu0
    %v348 = vadd.f32 0.0, %v347
    %349 = vmatmul.f32.gmra.mxu0 %v63
    %v350 = vpop.f32.mrf.mxu0
    %v351 = vadd.f32 0.0, %v350
    %352 = vdwg.mxu0
    %353 = vmatpush.msra.mxu0 %v191
    %354 = vmatpush.msra.mxu0 %v183
    %355 = vmatpush.msra.mxu0 %v175
    %356 = vmatpush.msra.mxu0 %v167
    %357 = vmatpush.msra.mxu0 %v159
    %358 = vmatpush.msra.mxu0 %v151
    %359 = vmatpush.msra.mxu0 %v143
    %360 = vmatpush.msra.mxu0 %v135
    %361 = vmatpush.msra.mxu0 %v127
    %362 = vmatpush.msra.mxu0 %v119
    %363 = vmatpush.msra.mxu0 %v111
    %364 = vmatpush.msra.mxu0 %v103
    %365 = vmatpush.msra.mxu0 %v95
    %366 = vmatpush.msra.mxu0 %v87
    %367 = vmatpush.msra.mxu0 %v79
    %368 = vmatpush.msra.mxu0 %v71
    %369 = vmatmul.f32.gmra.mxu0 %v62
    %v370 = vpop.f32.mrf.mxu0
    %v371 = vadd.f32 0.0, %v370
    %372 = vmatmul.f32.gmra.mxu0 %v63
    %v373 = vpop.f32.mrf.mxu0
    %v374 = vadd.f32 0.0, %v373
    %375 = vdwg.mxu0
    %v376 = vxor.u32 %v210, 2147483648
    %v377 = vxor.u32 %v233, 2147483648
    %v378 = vxor.u32 %v256, 2147483648
    %v379 = vxor.u32 %v279, 2147483648
    %v380 = vxor.u32 %v213, 2147483648
    %v381 = vxor.u32 %v236, 2147483648
    %v382 = vxor.u32 %v259, 2147483648
    %v383 = vxor.u32 %v282, 2147483648
    %v384 = vmul.f32 %v376, 1.442695
    %v385 = vpow.pop %v384
    %v386 = vmul.f32 %v377, 1.442695
    %v387 = vpow.pop %v386
    %v388 = vmul.f32 %v378, 1.442695
    %v389 = vpow.pop %v388
    %v390 = vmul.f32 %v379, 1.442695
    %v391 = vpow.pop %v390
    %v392 = vmul.f32 %v380, 1.442695
    %v393 = vpow.pop %v392
    %v394 = vmul.f32 %v381, 1.442695
    %v395 = vpow.pop %v394
    %v396 = vmul.f32 %v382, 1.442695
    %v397 = vpow.pop %v396
    %v398 = vmul.f32 %v383, 1.442695
    %v399 = vpow.pop %v398
    %v400 = vadd.f32 %v385, 1.0
    %v401 = vadd.f32 %v387, 1.0
    %v402 = vadd.f32 %v389, 1.0
    %v403 = vadd.f32 %v391, 1.0
    %v404 = vadd.f32 %v393, 1.0
    %v405 = vadd.f32 %v395, 1.0
    %v406 = vadd.f32 %v397, 1.0
    %v407 = vadd.f32 %v399, 1.0
    %v408 = vrcp.pop %v400
    %v409 = vmul.f32 %v400, %v408
    %v410 = vsub.f32 1.0, %v409
    %v411 = vmul.f32 %v408, %v410
    %v412 = vadd.f32 %v408, %v411
    %vm413 = vweird.f32 %v400
    %vm414 = vweird.f32 %v408
    %vm415 = vmor %vm413, %vm414
    %v416 = vsel %vm415, %v408, %v412
    %v417 = vand.u32 2147483647, %v400
    %vm418 = vcmp.eq.f32.partialorder %v417, 8.507059e+37
    %v419 = vand.u32 %v400, 2147483648
    %v420 = vor.u32 1.1754944e-38, %v419
    %v421 = vsel %vm418, %v420, %v416
    %v422 = vmul.f32 1.0, %v421
    %v423 = vrcp.pop %v401
    %v424 = vmul.f32 %v401, %v423
    %v425 = vsub.f32 1.0, %v424
    %v426 = vmul.f32 %v423, %v425
    %v427 = vadd.f32 %v423, %v426
    %vm428 = vweird.f32 %v401
    %vm429 = vweird.f32 %v423
    %vm430 = vmor %vm428, %vm429
    %v431 = vsel %vm430, %v423, %v427
    %v432 = vand.u32 2147483647, %v401
    %vm433 = vcmp.eq.f32.partialorder %v432, 8.507059e+37
    %v434 = vand.u32 %v401, 2147483648
    %v435 = vor.u32 1.1754944e-38, %v434
    %v436 = vsel %vm433, %v435, %v431
    %v437 = vmul.f32 1.0, %v436
    %v438 = vrcp.pop %v402
    %v439 = vmul.f32 %v402, %v438
    %v440 = vsub.f32 1.0, %v439
    %v441 = vmul.f32 %v438, %v440
    %v442 = vadd.f32 %v438, %v441
    %vm443 = vweird.f32 %v402
    %vm444 = vweird.f32 %v438
    %vm445 = vmor %vm443, %vm444
    %v446 = vsel %vm445, %v438, %v442
    %v447 = vand.u32 2147483647, %v402
    %vm448 = vcmp.eq.f32.partialorder %v447, 8.507059e+37
    %v449 = vand.u32 %v402, 2147483648
    %v450 = vor.u32 1.1754944e-38, %v449
    %v451 = vsel %vm448, %v450, %v446
    %v452 = vmul.f32 1.0, %v451
    %v453 = vrcp.pop %v403
    %v454 = vmul.f32 %v403, %v453
    %v455 = vsub.f32 1.0, %v454
    %v456 = vmul.f32 %v453, %v455
    %v457 = vadd.f32 %v453, %v456
    %vm458 = vweird.f32 %v403
    %vm459 = vweird.f32 %v453
    %vm460 = vmor %vm458, %vm459
    %v461 = vsel %vm460, %v453, %v457
    %v462 = vand.u32 2147483647, %v403
    %vm463 = vcmp.eq.f32.partialorder %v462, 8.507059e+37
    %v464 = vand.u32 %v403, 2147483648
    %v465 = vor.u32 1.1754944e-38, %v464
    %v466 = vsel %vm463, %v465, %v461
    %v467 = vmul.f32 1.0, %v466
    %v468 = vrcp.pop %v404
    %v469 = vmul.f32 %v404, %v468
    %v470 = vsub.f32 1.0, %v469
    %v471 = vmul.f32 %v468, %v470
    %v472 = vadd.f32 %v468, %v471
    %vm473 = vweird.f32 %v404
    %vm474 = vweird.f32 %v468
    %vm475 = vmor %vm473, %vm474
    %v476 = vsel %vm475, %v468, %v472
    %v477 = vand.u32 2147483647, %v404
    %vm478 = vcmp.eq.f32.partialorder %v477, 8.507059e+37
    %v479 = vand.u32 %v404, 2147483648
    %v480 = vor.u32 1.1754944e-38, %v479
    %v481 = vsel %vm478, %v480, %v476
    %v482 = vmul.f32 1.0, %v481
    %v483 = vrcp.pop %v405
    %v484 = vmul.f32 %v405, %v483
    %v485 = vsub.f32 1.0, %v484
    %v486 = vmul.f32 %v483, %v485
    %v487 = vadd.f32 %v483, %v486
    %vm488 = vweird.f32 %v405
    %vm489 = vweird.f32 %v483
    %vm490 = vmor %vm488, %vm489
    %v491 = vsel %vm490, %v483, %v487
    %v492 = vand.u32 2147483647, %v405
    %vm493 = vcmp.eq.f32.partialorder %v492, 8.507059e+37
    %v494 = vand.u32 %v405, 2147483648
    %v495 = vor.u32 1.1754944e-38, %v494
    %v496 = vsel %vm493, %v495, %v491
    %v497 = vmul.f32 1.0, %v496
    %v498 = vrcp.pop %v406
    %v499 = vmul.f32 %v406, %v498
    %v500 = vsub.f32 1.0, %v499
    %v501 = vmul.f32 %v498, %v500
    %v502 = vadd.f32 %v498, %v501
    %vm503 = vweird.f32 %v406
    %vm504 = vweird.f32 %v498
    %vm505 = vmor %vm503, %vm504
    %v506 = vsel %vm505, %v498, %v502
    %v507 = vand.u32 2147483647, %v406
    %vm508 = vcmp.eq.f32.partialorder %v507, 8.507059e+37
    %v509 = vand.u32 %v406, 2147483648
    %v510 = vor.u32 1.1754944e-38, %v509
    %v511 = vsel %vm508, %v510, %v506
    %v512 = vmul.f32 1.0, %v511
    %v513 = vrcp.pop %v407
    %v514 = vmul.f32 %v407, %v513
    %v515 = vsub.f32 1.0, %v514
    %v516 = vmul.f32 %v513, %v515
    %v517 = vadd.f32 %v513, %v516
    %vm518 = vweird.f32 %v407
    %vm519 = vweird.f32 %v513
    %vm520 = vmor %vm518, %vm519
    %v521 = vsel %vm520, %v513, %v517
    %v522 = vand.u32 2147483647, %v407
    %vm523 = vcmp.eq.f32.partialorder %v522, 8.507059e+37
    %v524 = vand.u32 %v407, 2147483648
    %v525 = vor.u32 1.1754944e-38, %v524
    %v526 = vsel %vm523, %v525, %v521
    %v527 = vmul.f32 1.0, %v526
    %v528 = vmul.f32 %v210, %v422
    %v529 = vmul.f32 %v233, %v437
    %v530 = vmul.f32 %v256, %v452
    %v531 = vmul.f32 %v279, %v467
    %v532 = vmul.f32 %v213, %v482
    %v533 = vmul.f32 %v236, %v497
    %v534 = vmul.f32 %v259, %v512
    %v535 = vmul.f32 %v282, %v527
    %v536 = vmul.f32 %v528, %v302
    %v537 = vmul.f32 %v529, %v325
    %v538 = vmul.f32 %v530, %v348
    %v539 = vmul.f32 %v531, %v371
    %v540 = vmul.f32 %v532, %v305
    %v541 = vmul.f32 %v533, %v328
    %v542 = vmul.f32 %v534, %v351
    %v543 = vmul.f32 %v535, %v374
    %v544 = vld [vmem:[#allocation7] sm:$0xff]
    %v545 = vld [vmem:[#allocation7 + $0x8] sm:$0xff]
    %v546 = vld [vmem:[#allocation7 + $0x10] sm:$0xff]
    %v547 = vld [vmem:[#allocation7 + $0x18] sm:$0xff]
    %v548 = vld [vmem:[#allocation7 + $0x20] sm:$0xff]
    %v549 = vld [vmem:[#allocation7 + $0x28] sm:$0xff]
    %v550 = vld [vmem:[#allocation7 + $0x30] sm:$0xff]
    %v551 = vld [vmem:[#allocation7 + $0x38] sm:$0xff]
    %v552 = vld [vmem:[#allocation7 + $0x40] sm:$0xff]
    %v553 = vld [vmem:[#allocation7 + $0x48] sm:$0xff]
    %v554 = vld [vmem:[#allocation7 + $0x50] sm:$0xff]
    %v555 = vld [vmem:[#allocation7 + $0x58] sm:$0xff]
    %v556 = vld [vmem:[#allocation7 + $0x60] sm:$0xff]
    %v557 = vld [vmem:[#allocation7 + $0x68] sm:$0xff]
    %v558 = vld [vmem:[#allocation7 + $0x70] sm:$0xff]
    %v559 = vld [vmem:[#allocation7 + $0x78] sm:$0xff]
    %v560 = vld [vmem:[#allocation7 + $0x80] sm:$0xff]
    %v561 = vld [vmem:[#allocation7 + $0x88] sm:$0xff]
    %v562 = vld [vmem:[#allocation7 + $0x90] sm:$0xff]
    %v563 = vld [vmem:[#allocation7 + $0x98] sm:$0xff]
    %v564 = vld [vmem:[#allocation7 + $0xa0] sm:$0xff]
    %v565 = vld [vmem:[#allocation7 + $0xa8] sm:$0xff]
    %v566 = vld [vmem:[#allocation7 + $0xb0] sm:$0xff]
    %v567 = vld [vmem:[#allocation7 + $0xb8] sm:$0xff]
    %v568 = vld [vmem:[#allocation7 + $0xc0] sm:$0xff]
    %v569 = vld [vmem:[#allocation7 + $0xc8] sm:$0xff]
    %v570 = vld [vmem:[#allocation7 + $0xd0] sm:$0xff]
    %v571 = vld [vmem:[#allocation7 + $0xd8] sm:$0xff]
    %v572 = vld [vmem:[#allocation7 + $0xe0] sm:$0xff]
    %v573 = vld [vmem:[#allocation7 + $0xe8] sm:$0xff]
    %v574 = vld [vmem:[#allocation7 + $0xf0] sm:$0xff]
    %v575 = vld [vmem:[#allocation7 + $0xf8] sm:$0xff]
    %v576 = vld [vmem:[#allocation7 + $0x100] sm:$0xff]
    %v577 = vld [vmem:[#allocation7 + $0x108] sm:$0xff]
    %v578 = vld [vmem:[#allocation7 + $0x110] sm:$0xff]
    %v579 = vld [vmem:[#allocation7 + $0x118] sm:$0xff]
    %v580 = vld [vmem:[#allocation7 + $0x120] sm:$0xff]
    %v581 = vld [vmem:[#allocation7 + $0x128] sm:$0xff]
    %v582 = vld [vmem:[#allocation7 + $0x130] sm:$0xff]
    %v583 = vld [vmem:[#allocation7 + $0x138] sm:$0xff]
    %v584 = vld [vmem:[#allocation7 + $0x140] sm:$0xff]
    %v585 = vld [vmem:[#allocation7 + $0x148] sm:$0xff]
    %v586 = vld [vmem:[#allocation7 + $0x150] sm:$0xff]
    %v587 = vld [vmem:[#allocation7 + $0x158] sm:$0xff]
    %v588 = vld [vmem:[#allocation7 + $0x160] sm:$0xff]
    %v589 = vld [vmem:[#allocation7 + $0x168] sm:$0xff]
    %v590 = vld [vmem:[#allocation7 + $0x170] sm:$0xff]
    %v591 = vld [vmem:[#allocation7 + $0x178] sm:$0xff]
    %v592 = vld [vmem:[#allocation7 + $0x180] sm:$0xff]
    %v593 = vld [vmem:[#allocation7 + $0x188] sm:$0xff]
    %v594 = vld [vmem:[#allocation7 + $0x190] sm:$0xff]
    %v595 = vld [vmem:[#allocation7 + $0x198] sm:$0xff]
    %v596 = vld [vmem:[#allocation7 + $0x1a0] sm:$0xff]
    %v597 = vld [vmem:[#allocation7 + $0x1a8] sm:$0xff]
    %v598 = vld [vmem:[#allocation7 + $0x1b0] sm:$0xff]
    %v599 = vld [vmem:[#allocation7 + $0x1b8] sm:$0xff]
    %v600 = vld [vmem:[#allocation7 + $0x1c0] sm:$0xff]
    %v601 = vld [vmem:[#allocation7 + $0x1c8] sm:$0xff]
    %v602 = vld [vmem:[#allocation7 + $0x1d0] sm:$0xff]
    %v603 = vld [vmem:[#allocation7 + $0x1d8] sm:$0xff]
    %v604 = vld [vmem:[#allocation7 + $0x1e0] sm:$0xff]
    %v605 = vld [vmem:[#allocation7 + $0x1e8] sm:$0xff]
    %v606 = vld [vmem:[#allocation7 + $0x1f0] sm:$0xff]
    %v607 = vld [vmem:[#allocation7 + $0x1f8] sm:$0xff]
    %608 = vmatpush.msra.mxu0 %v559
    %609 = vmatpush.msra.mxu0 %v558
    %610 = vmatpush.msra.mxu0 %v557
    %611 = vmatpush.msra.mxu0 %v556
    %612 = vmatpush.msra.mxu0 %v555
    %613 = vmatpush.msra.mxu0 %v554
    %614 = vmatpush.msra.mxu0 %v553
    %615 = vmatpush.msra.mxu0 %v552
    %616 = vmatpush.msra.mxu0 %v551
    %617 = vmatpush.msra.mxu0 %v550
    %618 = vmatpush.msra.mxu0 %v549
    %619 = vmatpush.msra.mxu0 %v548
    %620 = vmatpush.msra.mxu0 %v547
    %621 = vmatpush.msra.mxu0 %v546
    %622 = vmatpush.msra.mxu0 %v545
    %623 = vmatpush.msra.mxu0 %v544
    %624 = vmatmul.f32.gmra.mxu0 %v536
    %v625 = vpop.f32.mrf.mxu0
    %v626 = vadd.f32 0.0, %v625
    %627 = vmatmul.f32.gmra.mxu0 %v540
    %v628 = vpop.f32.mrf.mxu0
    %v629 = vadd.f32 0.0, %v628
    %630 = vdwg.mxu0
    %631 = vmatpush.msra.mxu0 %v575
    %632 = vmatpush.msra.mxu0 %v574
    %633 = vmatpush.msra.mxu0 %v573
    %634 = vmatpush.msra.mxu0 %v572
    %635 = vmatpush.msra.mxu0 %v571
    %636 = vmatpush.msra.mxu0 %v570
    %637 = vmatpush.msra.mxu0 %v569
    %638 = vmatpush.msra.mxu0 %v568
    %639 = vmatpush.msra.mxu0 %v567
    %640 = vmatpush.msra.mxu0 %v566
    %641 = vmatpush.msra.mxu0 %v565
    %642 = vmatpush.msra.mxu0 %v564
    %643 = vmatpush.msra.mxu0 %v563
    %644 = vmatpush.msra.mxu0 %v562
    %645 = vmatpush.msra.mxu0 %v561
    %646 = vmatpush.msra.mxu0 %v560
    %647 = vmatmul.f32.gmra.mxu0 %v537
    %v648 = vpop.f32.mrf.mxu0
    %v649 = vadd.f32 %v626, %v648
    %650 = vmatmul.f32.gmra.mxu0 %v541
    %v651 = vpop.f32.mrf.mxu0
    %v652 = vadd.f32 %v629, %v651
    %653 = vdwg.mxu0
    %654 = vmatpush.msra.mxu0 %v591
    %655 = vmatpush.msra.mxu0 %v590
    %656 = vmatpush.msra.mxu0 %v589
    %657 = vmatpush.msra.mxu0 %v588
    %658 = vmatpush.msra.mxu0 %v587
    %659 = vmatpush.msra.mxu0 %v586
    %660 = vmatpush.msra.mxu0 %v585
    %661 = vmatpush.msra.mxu0 %v584
    %662 = vmatpush.msra.mxu0 %v583
    %663 = vmatpush.msra.mxu0 %v582
    %664 = vmatpush.msra.mxu0 %v581
    %665 = vmatpush.msra.mxu0 %v580
    %666 = vmatpush.msra.mxu0 %v579
    %667 = vmatpush.msra.mxu0 %v578
    %668 = vmatpush.msra.mxu0 %v577
    %669 = vmatpush.msra.mxu0 %v576
    %670 = vmatmul.f32.gmra.mxu0 %v538
    %v671 = vpop.f32.mrf.mxu0
    %v672 = vadd.f32 %v649, %v671
    %673 = vmatmul.f32.gmra.mxu0 %v542
    %v674 = vpop.f32.mrf.mxu0
    %v675 = vadd.f32 %v652, %v674
    %676 = vdwg.mxu0
    %677 = vmatpush.msra.mxu0 %v607
    %678 = vmatpush.msra.mxu0 %v606
    %679 = vmatpush.msra.mxu0 %v605
    %680 = vmatpush.msra.mxu0 %v604
    %681 = vmatpush.msra.mxu0 %v603
    %682 = vmatpush.msra.mxu0 %v602
    %683 = vmatpush.msra.mxu0 %v601
    %684 = vmatpush.msra.mxu0 %v600
    %685 = vmatpush.msra.mxu0 %v599
    %686 = vmatpush.msra.mxu0 %v598
    %687 = vmatpush.msra.mxu0 %v597
    %688 = vmatpush.msra.mxu0 %v596
    %689 = vmatpush.msra.mxu0 %v595
    %690 = vmatpush.msra.mxu0 %v594
    %691 = vmatpush.msra.mxu0 %v593
    %692 = vmatpush.msra.mxu0 %v592
    %693 = vmatmul.f32.gmra.mxu0 %v539
    %v694 = vpop.f32.mrf.mxu0
    %v695 = vadd.f32 %v672, %v694
    %696 = vmatmul.f32.gmra.mxu0 %v543
    %v697 = vpop.f32.mrf.mxu0
    %v698 = vadd.f32 %v675, %v697
    %699 = vdwg.mxu0
    %700 = vst [vmem:[#allocation8] sm:$0xff] %v695
    %701 = vst [vmem:[#allocation8 + $0x8] sm:$0xff] %v698
    // Predicated region
    $region26: #{tpu_custom_call.1} parent=1 // pred_check
      _
    $region27: #{tpu_custom_call.1} parent=1 // pred_check_branch
      %703 = sbr.rel (0) target = $region29
    $region28: #{tpu_custom_call.1} parent=1 // pred_region
      %705 = vsyncadd [#allocation4], 0
      %s706 = sshll.u32 [#allocation8], 4
      %s707 = int_to_ptr.vmem [resolvable:$true] %s706
      %s708 = sshll.u32 %s3, 4
      %s709 = int_to_ptr.hbm [resolvable:$true] %s708
      %714 = dma.vmem_to_hbm [thread:$0]  %s707, 256, %s709, [#allocation4], 128, 128, 8
    $region29: #{tpu_custom_call.1} parent=1 // pred_fallthru
      _
    // Predicated region
    $region30: #{tpu_custom_call.1} parent=1 // pred_check
      _
    $region31: #{tpu_custom_call.1} parent=1 // pred_check_branch
      %716 = sbr.rel (0) target = $region33
    $region32: #{tpu_custom_call.1} parent=1 // pred_region
      %718 = dma.done [#allocation4], 256
    $region33: #{tpu_custom_call.1} parent=1 // pred_fallthru
      _
    %719 = vsyncpa [#allocation3], 1
    %720 = vsyncpa [#allocation6], 1
    %721 = vsyncpa [#allocation4], 1

</llo_original>
